<compile_context>
chip_gen: v7x
topology: tpu7x:2x2x1
jax: 0.10.0
libtpu: 0.0.40
codegen_flags: <defaults>
</compile_context>

<pallas_src>
import functools

import jax
import jax.numpy as jnp
from jax import lax
from jax.experimental import pallas as pl
from jax.experimental.pallas import tpu as pltpu


# ---------------------------------------------------------------------------
# Pallas kernel: O = relu(W @ X + b), bf16 operands, f32 accumulate/epilogue.
# ---------------------------------------------------------------------------
def _wx_bias_relu_kernel(w_ref, x_ref, b_ref, o_ref):
    # w_ref: (Cout, K)  conv weight with BN scale folded in
    # x_ref: (K, T)     activation tile, spatial axis lane-dense
    # b_ref: (Cout, 1)  folded BN bias (f32), possibly per-image
    # o_ref: (Cout, T)
    acc = jnp.dot(w_ref[...], x_ref[...], preferred_element_type=jnp.float32)
    o_ref[...] = jnp.maximum(acc + b_ref[...], 0.0).astype(o_ref.dtype)


# ---------------------------------------------------------------------------
# Helpers
# ---------------------------------------------------------------------------
def _round_up(a, m):
    return ((a + m - 1) // m) * m


def _fold_bn(p, eps):
    """Fold eval-mode BatchNorm into the conv: returns (w * scale, bias)."""
    scale = p["gamma"] / jnp.sqrt(p["var"] + eps)
    w = p["w"] * scale[:, None, None, None]
    b = p["beta"] - p["mean"] * scale
    return w, b


def _im2col_3x3_dilated(x, d):
    """(N, C, H, W) -> (N, 9*C, H*W); taps ordered (ky, kx) outer, channel inner."""
    N, C, H, W = x.shape
    xp = jnp.pad(x, ((0, 0), (0, 0), (d, d), (d, d)))
    taps = [xp[:, :, ky * d:ky * d + H, kx * d:kx * d + W]
            for ky in range(3) for kx in range(3)]
    return jnp.stack(taps, axis=1).reshape(N, 9 * C, H * W)


def _vmem_limit(*block_bytes):
    # Double-buffered blocks + generous headroom; 16-32 MiB is safe on
    # v5e/v6e (128 MiB VMEM) and v7x (64 MiB VMEM).
    need = 2 * sum(block_bytes)
    return int(min(max(8 * need, 16 << 20), 32 << 20))


# ---------------------------------------------------------------------------
# Forward pass
# ---------------------------------------------------------------------------
def atrous_pyramid_pooling(x, params, *, rates=(1, 6, 12, 18), eps=1e-5,
                           tile_hw=512, compute_dtype=jnp.bfloat16):
    """AtrousPyramidPooling forward (eval mode) on NCHW input."""
    N, Cin, H, W = x.shape
    HW = H * W
    R = params["pool"]["w"].shape[0]
    K9 = 9 * Cin
    nb = len(rates)
    cdt = compute_dtype
    ci = jnp.dtype(cdt).itemsize

    # Spatial tiling: lane-dense tiles, cdiv grid + zero padding (no asserts).
    t = min(tile_hw, _round_up(HW, 128))
    g = pl.cdiv(HW, t)
    hw_pad = g * t

    # ---- pool branch (tiny; plain JAX).  Bilinear upsample of a 1x1 map with
    # align_corners=True is a broadcast, so this branch's contribution to the
    # 1x1 bottleneck conv folds exactly into a per-image bias (below).
    wp, bp = _fold_bn(params["pool"], eps)
    pooled = jnp.mean(x, axis=(2, 3))                                   # (N, Cin)
    pool_feat = jnp.maximum(
        jnp.dot(pooled, wp.reshape(R, Cin).T,
                precision=lax.Precision.HIGHEST) + bp, 0.0)             # (N, R)

    # ---- four dilated 3x3 branches -> one pallas_call producing the
    # channel-concatenated (N, 4R, HW) tensor directly.
    w_list, b_list, x_list = [], [], []
    for i, d in enumerate(rates):
        w, b = _fold_bn(params[f"conv{i + 1}"], eps)
        w_list.append(jnp.transpose(w, (0, 2, 3, 1)).reshape(R, K9))    # (R, 9Cin)
        b_list.append(b)
        x_list.append(_im2col_3x3_dilated(x, d))                        # (N, 9Cin, HW)
    w9s = jnp.stack(w_list).astype(cdt)                                 # (nb, R, K9)
    b9s = jnp.stack(b_list).reshape(nb, R, 1).astype(jnp.float32)       # (nb, R, 1)
    x9s = jnp.stack(x_list)                                             # (nb, N, K9, HW)
    if hw_pad != HW:
        x9s = jnp.pad(x9s, ((0, 0), (0, 0), (0, 0), (0, hw_pad - HW)))
    x9s = x9s.astype(cdt)

    cat4 = pl.pallas_call(
        _wx_bias_relu_kernel,
        out_shape=jax.ShapeDtypeStruct((N, nb * R, hw_pad), cdt),
        grid_spec=pltpu.PrefetchScalarGridSpec(
            num_scalar_prefetch=0,
            grid=(nb, N, g),
            in_specs=[
                pl.BlockSpec((None, R, K9), lambda b, n, j: (b, 0, 0)),
                pl.BlockSpec((None, None, K9, t), lambda b, n, j: (b, n, 0, j)),
                pl.BlockSpec((None, R, 1), lambda b, n, j: (b, 0, 0)),
            ],
            out_specs=pl.BlockSpec((None, R, t), lambda b, n, j: (n, b, j)),
        ),
        compiler_params=pltpu.CompilerParams(
            dimension_semantics=("parallel", "parallel", "parallel"),
            vmem_limit_bytes=_vmem_limit(R * K9 * ci, K9 * t * ci,
                                         R * 4, R * t * ci)),
    )(w9s, x9s, b9s)                                                    # (N, 4R, hw_pad)

    # ---- bottleneck 1x1 conv + BN + ReLU; pool branch folded into the bias.
    wb, bb = _fold_bn(params["bottle"], eps)
    wb2 = wb.reshape(R, 5 * R)
    b_eff = jnp.dot(pool_feat, wb2[:, :R].T,
                    precision=lax.Precision.HIGHEST) + bb               # (N, R)
    b_eff = b_eff.reshape(N, R, 1).astype(jnp.float32)
    wb_rest = wb2[:, R:].astype(cdt)                                    # (R, 4R)

    out = pl.pallas_call(
        _wx_bias_relu_kernel,
        out_shape=jax.ShapeDtypeStruct((N, R, hw_pad), jnp.float32),
        grid_spec=pltpu.PrefetchScalarGridSpec(
            num_scalar_prefetch=0,
            grid=(N, g),
            in_specs=[
                pl.BlockSpec((R, nb * R), lambda n, j: (0, 0)),
                pl.BlockSpec((None, nb * R, t), lambda n, j: (n, 0, j)),
                pl.BlockSpec((None, R, 1), lambda n, j: (n, 0, 0)),
            ],
            out_specs=pl.BlockSpec((None, R, t), lambda n, j: (n, 0, j)),
        ),
        compiler_params=pltpu.CompilerParams(
            dimension_semantics=("parallel", "parallel"),
            vmem_limit_bytes=_vmem_limit(R * nb * R * ci, nb * R * t * ci,
                                         R * 4, R * t * 4)),
    )(wb_rest, cat4, b_eff)

    if hw_pad != HW:
        out = out[:, :, :HW]
    # Dropout2d(p=0.2) is identity in eval mode.
    return out.reshape(N, R, H, W)


# ---------------------------------------------------------------------------
# Pure-JAX f32 reference (direct translation of the PyTorch forward)
# ---------------------------------------------------------------------------
def _ref_conv_bn_relu(x, p, eps, dilation=1):
    w = p["w"]
    pad = dilation if w.shape[2] == 3 else 0
    y = lax.conv_general_dilated(
        x, w, window_strides=(1, 1), padding=((pad, pad), (pad, pad)),
        rhs_dilation=(dilation, dilation),
        dimension_numbers=("NCHW", "OIHW", "NCHW"),
        precision=lax.Precision.HIGHEST)
    scale = p["gamma"] / jnp.sqrt(p["var"] + eps)
    bias = p["beta"] - p["mean"] * scale
    return jnp.maximum(y * scale[None, :, None, None]
                       + bias[None, :, None, None], 0.0)


def _reference(x, params, rates=(1, 6, 12, 18), eps=1e-5):
    N, _, H, W = x.shape
    pool = _ref_conv_bn_relu(jnp.mean(x, axis=(2, 3), keepdims=True),
                             params["pool"], eps)
    pool = jnp.broadcast_to(pool, (N, pool.shape[1], H, W))   # bilinear 1x1 -> HxW
    branches = [_ref_conv_bn_relu(x, params[f"conv{i + 1}"], eps, dilation=d)
                for i, d in enumerate(rates)]
    cat = jnp.concatenate([pool] + branches, axis=1)
    return _ref_conv_bn_relu(cat, params["bottle"], eps)      # dropout: eval no-op


def _make_conv_bn_params(key, cout, cin, k):
    kw, kg, kb, km, kv = jax.random.split(key, 5)
    return dict(
        w=jax.random.normal(kw, (cout, cin, k, k), jnp.float32) * 0.1,
        gamma=jax.random.uniform(kg, (cout,), minval=0.5, maxval=1.5),
        beta=jax.random.normal(kb, (cout,)) * 0.1,
        mean=jax.random.normal(km, (cout,)) * 0.1,
        var=jax.random.uniform(kv, (cout,), minval=0.5, maxval=1.5),
    )


if __name__ == "__main__":
    N, Cin, H, W = 2, 4, 16, 16      # small demo shapes (HW = 256 lanes)
    R = 32                           # reduction_dim (256 in the real module)
    rates = (1, 6, 12, 18)

    key = jax.random.PRNGKey(0)
    kx, kp, k1, k2, k3, k4, kbt = jax.random.split(key, 7)
    x = jax.random.normal(kx, (N, Cin, H, W), dtype=jnp.float32)
    params = {
        "pool": _make_conv_bn_params(kp, R, Cin, 1),
        "conv1": _make_conv_bn_params(k1, R, Cin, 3),
        "conv2": _make_conv_bn_params(k2, R, Cin, 3),
        "conv3": _make_conv_bn_params(k3, R, Cin, 3),
        "conv4": _make_conv_bn_params(k4, R, Cin, 3),
        "bottle": _make_conv_bn_params(kbt, R, 5 * R, 1),
    }

    fwd = jax.jit(functools.partial(atrous_pyramid_pooling, rates=rates))
    out = jax.block_until_ready(fwd(x, params))

    ref = _reference(x, params, rates=rates)
    assert out.shape == (N, R, H, W)
    # bf16 matmul operands vs f32 reference -> tolerance-gated comparison.
    assert jnp.allclose(out, ref, atol=5e-2, rtol=5e-2), "mismatch vs reference"

    print("KERNEL_OK")
</pallas_src>

<mosaic_0001>
module attributes {stable_mosaic.version = 11 : i64} {
  func.func @_wx_bias_relu_kernel(%arg0: i32, %arg1: i32, %arg2: i32, %arg3: memref<1x32x36xbf16, #tpu.memory_space<vmem>>, %arg4: memref<1x1x36x256xbf16, #tpu.memory_space<vmem>>, %arg5: memref<1x32x1xf32, #tpu.memory_space<vmem>>, %arg6: memref<1x32x256xbf16, #tpu.memory_space<vmem>>) attributes {dimension_semantics = [#tpu.dimension_semantics<parallel>, #tpu.dimension_semantics<parallel>, #tpu.dimension_semantics<parallel>], iteration_bounds = array<i64: 4, 2, 1>, scalar_prefetch = 0 : i64, scratch_operands = 0 : i64, tpu.core_type = #tpu.core_type<tc>, window_params = [{transform_indices = @transform_0, window_bounds = array<i64: 1, 32, 36>}, {transform_indices = @transform_1, window_bounds = array<i64: 1, 1, 36, 256>}, {transform_indices = @transform_2, window_bounds = array<i64: 1, 32, 1>}, {transform_indices = @transform_3, window_bounds = array<i64: 1, 32, 256>}]} {
    %c0 = arith.constant 0 : index
    %c0_0 = arith.constant 0 : index
    %c0_1 = arith.constant 0 : index
    %0 = vector.load %arg3[%c0, %c0_0, %c0_1] : memref<1x32x36xbf16, #tpu.memory_space<vmem>>, vector<1x32x36xbf16>
    %1 = vector.shape_cast %0 : vector<1x32x36xbf16> to vector<32x36xbf16>
    %c0_2 = arith.constant 0 : index
    %c0_3 = arith.constant 0 : index
    %c0_4 = arith.constant 0 : index
    %c0_5 = arith.constant 0 : index
    %2 = vector.load %arg4[%c0_2, %c0_3, %c0_4, %c0_5] : memref<1x1x36x256xbf16, #tpu.memory_space<vmem>>, vector<1x1x36x256xbf16>
    %3 = vector.shape_cast %2 : vector<1x1x36x256xbf16> to vector<36x256xbf16>
    %cst = arith.constant dense<0.000000e+00> : vector<32x256xf32>
    %4 = tpu.matmul %1, %3, %cst {dimension_numbers = #tpu.dot_dimension_numbers<[1], [0], [0], [1], [0, 0, 1, 1], [], []>} : vector<32x36xbf16>, vector<36x256xbf16>, vector<32x256xf32> -> vector<32x256xf32>
    %c0_6 = arith.constant 0 : index
    %c0_7 = arith.constant 0 : index
    %c0_8 = arith.constant 0 : index
    %5 = vector.load %arg5[%c0_6, %c0_7, %c0_8] : memref<1x32x1xf32, #tpu.memory_space<vmem>>, vector<1x32x1xf32>
    %6 = vector.shape_cast %5 : vector<1x32x1xf32> to vector<32x1xf32>
    %7 = vector.broadcast %6 : vector<32x1xf32> to vector<32x256xf32>
    %8 = arith.addf %4, %7 : vector<32x256xf32>
    %cst_9 = arith.constant 0.000000e+00 : f32
    %9 = vector.broadcast %cst_9 : f32 to vector<32x256xf32>
    %10 = arith.maximumf %8, %9 : vector<32x256xf32>
    %11 = arith.truncf %10 : vector<32x256xf32> to vector<32x256xbf16>
    %c0_10 = arith.constant 0 : index
    %c0_11 = arith.constant 0 : index
    %c0_12 = arith.constant 0 : index
    %12 = vector.load %arg6[%c0_10, %c0_11, %c0_12] : memref<1x32x256xbf16, #tpu.memory_space<vmem>>, vector<1x32x256xbf16>
    %13 = vector.shape_cast %12 : vector<1x32x256xbf16> to vector<32x256xbf16>
    %14 = vector.shape_cast %11 : vector<32x256xbf16> to vector<1x32x256xbf16>
    tpu.vector_store %arg6[%c0_10, %c0_11, %c0_12], %14 {strides = array<i32>} : memref<1x32x256xbf16, #tpu.memory_space<vmem>>, vector<1x32x256xbf16>,
    return
  }
  func.func @transform_0(%arg0: i32, %arg1: i32, %arg2: i32) -> (i32, i32, i32) {
    %c0_i32 = arith.constant 0 : i32
    %c0_i32_0 = arith.constant 0 : i32
    %c0_i32_1 = arith.constant 0 : i32
    return %arg0, %c0_i32, %c0_i32_0 : i32, i32, i32
  }
  func.func @transform_1(%arg0: i32, %arg1: i32, %arg2: i32) -> (i32, i32, i32, i32) {
    %c0_i32 = arith.constant 0 : i32
    %c0_i32_0 = arith.constant 0 : i32
    return %arg0, %arg1, %c0_i32, %arg2 : i32, i32, i32, i32
  }
  func.func @transform_2(%arg0: i32, %arg1: i32, %arg2: i32) -> (i32, i32, i32) {
    %c0_i32 = arith.constant 0 : i32
    %c0_i32_0 = arith.constant 0 : i32
    %c0_i32_1 = arith.constant 0 : i32
    return %arg0, %c0_i32, %c0_i32_0 : i32, i32, i32
  }
  func.func @transform_3(%arg0: i32, %arg1: i32, %arg2: i32) -> (i32, i32, i32) {
    %c0_i32 = arith.constant 0 : i32
    return %arg1, %arg0, %arg2 : i32, i32, i32
  }
}

module attributes {stable_mosaic.version = 11 : i64} {
  func.func @_wx_bias_relu_kernel(%arg0: i32, %arg1: i32, %arg2: memref<32x128xbf16, #tpu.memory_space<vmem>>, %arg3: memref<1x128x256xbf16, #tpu.memory_space<vmem>>, %arg4: memref<1x32x1xf32, #tpu.memory_space<vmem>>, %arg5: memref<1x32x256xf32, #tpu.memory_space<vmem>>) attributes {dimension_semantics = [#tpu.dimension_semantics<parallel>, #tpu.dimension_semantics<parallel>], iteration_bounds = array<i64: 2, 1>, scalar_prefetch = 0 : i64, scratch_operands = 0 : i64, tpu.core_type = #tpu.core_type<tc>, window_params = [{pipeline_mode = #tpu.pipeline_mode<synchronous>, transform_indices = @transform_0, window_bounds = array<i64: 32, 128>}, {transform_indices = @transform_1, window_bounds = array<i64: 1, 128, 256>}, {transform_indices = @transform_2, window_bounds = array<i64: 1, 32, 1>}, {transform_indices = @transform_3, window_bounds = array<i64: 1, 32, 256>}]} {
    %c0 = arith.constant 0 : index
    %c0_0 = arith.constant 0 : index
    %0 = vector.load %arg2[%c0, %c0_0] : memref<32x128xbf16, #tpu.memory_space<vmem>>, vector<32x128xbf16>
    %c0_1 = arith.constant 0 : index
    %c0_2 = arith.constant 0 : index
    %c0_3 = arith.constant 0 : index
    %1 = vector.load %arg3[%c0_1, %c0_2, %c0_3] : memref<1x128x256xbf16, #tpu.memory_space<vmem>>, vector<1x128x256xbf16>
    %2 = vector.shape_cast %1 : vector<1x128x256xbf16> to vector<128x256xbf16>
    %cst = arith.constant dense<0.000000e+00> : vector<32x256xf32>
    %3 = tpu.matmul %0, %2, %cst {dimension_numbers = #tpu.dot_dimension_numbers<[1], [0], [0], [1], [0, 0, 1, 1], [], []>} : vector<32x128xbf16>, vector<128x256xbf16>, vector<32x256xf32> -> vector<32x256xf32>
    %c0_4 = arith.constant 0 : index
    %c0_5 = arith.constant 0 : index
    %c0_6 = arith.constant 0 : index
    %4 = vector.load %arg4[%c0_4, %c0_5, %c0_6] : memref<1x32x1xf32, #tpu.memory_space<vmem>>, vector<1x32x1xf32>
    %5 = vector.shape_cast %4 : vector<1x32x1xf32> to vector<32x1xf32>
    %6 = vector.broadcast %5 : vector<32x1xf32> to vector<32x256xf32>
    %7 = arith.addf %3, %6 : vector<32x256xf32>
    %cst_7 = arith.constant 0.000000e+00 : f32
    %8 = vector.broadcast %cst_7 : f32 to vector<32x256xf32>
    %9 = arith.maximumf %7, %8 : vector<32x256xf32>
    %c0_8 = arith.constant 0 : index
    %c0_9 = arith.constant 0 : index
    %c0_10 = arith.constant 0 : index
    %10 = vector.load %arg5[%c0_8, %c0_9, %c0_10] : memref<1x32x256xf32, #tpu.memory_space<vmem>>, vector<1x32x256xf32>
    %11 = vector.shape_cast %10 : vector<1x32x256xf32> to vector<32x256xf32>
    %12 = vector.shape_cast %9 : vector<32x256xf32> to vector<1x32x256xf32>
    tpu.vector_store %arg5[%c0_8, %c0_9, %c0_10], %12 {strides = array<i32>} : memref<1x32x256xf32, #tpu.memory_space<vmem>>, vector<1x32x256xf32>,
    return
  }
  func.func @transform_0(%arg0: i32, %arg1: i32) -> (i32, i32) {
    %c0_i32 = arith.constant 0 : i32
    %c0_i32_0 = arith.constant 0 : i32
    %c0_i32_1 = arith.constant 0 : i32
    return %c0_i32, %c0_i32_0 : i32, i32
  }
  func.func @transform_1(%arg0: i32, %arg1: i32) -> (i32, i32, i32) {
    %c0_i32 = arith.constant 0 : i32
    %c0_i32_0 = arith.constant 0 : i32
    return %arg0, %c0_i32, %arg1 : i32, i32, i32
  }
  func.func @transform_2(%arg0: i32, %arg1: i32) -> (i32, i32, i32) {
    %c0_i32 = arith.constant 0 : i32
    %c0_i32_0 = arith.constant 0 : i32
    %c0_i32_1 = arith.constant 0 : i32
    return %arg0, %c0_i32, %c0_i32_0 : i32, i32, i32
  }
  func.func @transform_3(%arg0: i32, %arg1: i32) -> (i32, i32, i32) {
    %c0_i32 = arith.constant 0 : i32
    %c0_i32_0 = arith.constant 0 : i32
    return %arg0, %c0_i32, %arg1 : i32, i32, i32
  }
}

</mosaic_0001>

<llo_original>
// kernel: atrous_pyramid_pooling.2
$region0: #{atrous_pyramid_pooling.2}
  #allocation0 [shape = 'u32[]', space=smem, size = 0x4, offset = 0x4, fixed_abs, tag = 'smem constant byte address 0x4 - core index']
  #allocation1 [shape = 'u32[144,128]{1,0:T(1,128)}', space=vmem, size = 0x12000, scoped, tag = 'internal scratch']
  %s0 = inlined_call_operand.vmem [shape: bf16[4,32,36], index: 0, kind: input, shape index: {}]
  %s1 = inlined_call_operand.vmem [shape: bf16[4,2,36,256], index: 1, kind: input, shape index: {}]
  %s2 = inlined_call_operand.vmem [shape: f32[4,32,1], index: 2, kind: input, shape index: {}]
  %s3 = inlined_call_operand.vmem [shape: bf16[2,128,256], index: 3, kind: output, shape index: {}]
  %s4 = sld [smem:[#allocation0]]
  $region45: #{atrous_pyramid_pooling.2} parent=0
    _
  %s6 = ssub.s32 1, %s4
  %s7 = scalar_select 0, %s6, %s4
  loop: start=0, step=1, limit=10
  $region2: #{atrous_pyramid_pooling.2} parent=0 // loop_pre_header
    _
  $region3: #{atrous_pyramid_pooling.2} parent=0 // loop_header
    %s9 = sphi 0, %s13
    %p10 = scmp.ge.s32.totalorder %s9, 10
    %s16 = sphi 0, %s35
    %s17 = sphi 0, %s31
    %s18 = sphi 0, %s27
    %s19 = sphi 0, %s16
    %s20 = sphi 0, %s17
    %s21 = sphi 0, %s18
    %s22 = sphi 0, %s19
    %s23 = sphi 0, %s20
    %s24 = sphi 0, %s21
    %s38 = sphi 0, %s40
    %s41 = sphi 0, %s38
    %s42 = sphi 0, %s41
    %s58 = sphi 0, %s42
    %s68 = sphi 0, %s70
    %s71 = sphi 0, %s68
    %s72 = sphi 0, %s71
    %s88 = sphi 0, %s72
    %s94 = sphi 0, %s96
    %s97 = sphi 0, %s94
    %s98 = sphi 0, %s97
    %s114 = sphi 0, %s98
    %s124 = sphi 0, %s126
    %s127 = sphi 0, %s124
    %s128 = sphi 0, %s127
    %s144 = sphi 0, %s128
  $region4: #{atrous_pyramid_pooling.2} parent=0 // loop_header_branch
    %12 = sbr.rel (%p10) target = $region8
  $region5: #{atrous_pyramid_pooling.2} parent=0 // loop_body
    %s14 = ssub.s32 %s9, 1
    %s15 = ssub.s32 %s9, 2
    %s25 = sadd.s32 1, %s18
    %p26 = scmp.ge.s32.totalorder %s25, 1
    %s27 = scalar_select %p26, 0, %s25
    %s28 = sadd.s32 1, %s17
    %s29 = scalar_select %p26, %s28, %s17
    %p30 = scmp.ge.s32.totalorder %s29, 2
    %s31 = scalar_select %p30, 0, %s29
    %s32 = sadd.s32 1, %s16
    %s33 = scalar_select %p30, %s32, %s16
    %p34 = scmp.ge.s32.totalorder %s33, 4
    %s35 = scalar_select %p34, 0, %s33
    %s36 = ssub.s32 %s16, %s35
    %p37 = scmp.eq.s32.totalorder %s36, 0
    %s39 = sadd.s32 %s38, 1
    %s40 = scalar_select %p37, %s38, %s39
    %p43 = pneg %p37
    %p44 = scmp.eq.s32.totalorder %s9, 7
    %p45 = por %p43, %p44
    %p46 = scmp.ne.s32.totalorder %s38, %s41
    %p47 = scmp.eq.s32.totalorder %s9, 0
    %p48 = por %p46, %p47
    %p49 = scmp.ne.s32.totalorder %s38, %s41
    %p50 = scmp.eq.s32.totalorder %s14, 7
    %p51 = por %p49, %p50
    %p52 = scmp.ne.s32.totalorder %s41, %s42
    %p53 = scmp.eq.s32.totalorder %s14, 0
    %p54 = por %p52, %p53
    %p55 = scmp.ne.s32.totalorder %s41, %s42
    %p56 = scmp.eq.s32.totalorder %s15, 7
    %p57 = por %p55, %p56
    %p59 = scmp.ne.s32.totalorder %s42, %s58
    %p60 = scmp.eq.s32.totalorder %s15, 0
    %p61 = por %p59, %p60
    %s62 = ssub.s32 %s16, %s35
    %s63 = ssub.s32 %s17, %s31
    %s64 = sor.u32 %s62, %s63
    %s65 = ssub.s32 %s18, %s27
    %s66 = sor.u32 %s64, %s65
    %p67 = scmp.eq.s32.totalorder %s66, 0
    %s69 = sadd.s32 %s68, 1
    %s70 = scalar_select %p67, %s68, %s69
    %p73 = pneg %p67
    %p74 = scmp.eq.s32.totalorder %s9, 7
    %p75 = por %p73, %p74
    %p76 = scmp.ne.s32.totalorder %s68, %s71
    %p77 = scmp.eq.s32.totalorder %s9, 0
    %p78 = por %p76, %p77
    %p79 = scmp.ne.s32.totalorder %s68, %s71
    %p80 = scmp.eq.s32.totalorder %s14, 7
    %p81 = por %p79, %p80
    %p82 = scmp.ne.s32.totalorder %s71, %s72
    %p83 = scmp.eq.s32.totalorder %s14, 0
    %p84 = por %p82, %p83
    %p85 = scmp.ne.s32.totalorder %s71, %s72
    %p86 = scmp.eq.s32.totalorder %s15, 7
    %p87 = por %p85, %p86
    %p89 = scmp.ne.s32.totalorder %s72, %s88
    %p90 = scmp.eq.s32.totalorder %s15, 0
    %p91 = por %p89, %p90
    %s92 = ssub.s32 %s16, %s35
    %p93 = scmp.eq.s32.totalorder %s92, 0
    %s95 = sadd.s32 %s94, 1
    %s96 = scalar_select %p93, %s94, %s95
    %p99 = pneg %p93
    %p100 = scmp.eq.s32.totalorder %s9, 7
    %p101 = por %p99, %p100
    %p102 = scmp.ne.s32.totalorder %s94, %s97
    %p103 = scmp.eq.s32.totalorder %s9, 0
    %p104 = por %p102, %p103
    %p105 = scmp.ne.s32.totalorder %s94, %s97
    %p106 = scmp.eq.s32.totalorder %s14, 7
    %p107 = por %p105, %p106
    %p108 = scmp.ne.s32.totalorder %s97, %s98
    %p109 = scmp.eq.s32.totalorder %s14, 0
    %p110 = por %p108, %p109
    %p111 = scmp.ne.s32.totalorder %s97, %s98
    %p112 = scmp.eq.s32.totalorder %s15, 7
    %p113 = por %p111, %p112
    %p115 = scmp.ne.s32.totalorder %s98, %s114
    %p116 = scmp.eq.s32.totalorder %s15, 0
    %p117 = por %p115, %p116
    %s118 = ssub.s32 %s17, %s31
    %s119 = ssub.s32 %s16, %s35
    %s120 = sor.u32 %s118, %s119
    %s121 = ssub.s32 %s18, %s27
    %s122 = sor.u32 %s120, %s121
    %p123 = scmp.eq.s32.totalorder %s122, 0
    %s125 = sadd.s32 %s124, 1
    %s126 = scalar_select %p123, %s124, %s125
    %p129 = pneg %p123
    %p130 = scmp.eq.s32.totalorder %s9, 7
    %p131 = por %p129, %p130
    %p132 = scmp.ne.s32.totalorder %s124, %s127
    %p133 = scmp.eq.s32.totalorder %s9, 0
    %p134 = por %p132, %p133
    %p135 = scmp.ne.s32.totalorder %s124, %s127
    %p136 = scmp.eq.s32.totalorder %s14, 7
    %p137 = por %p135, %p136
    %p138 = scmp.ne.s32.totalorder %s127, %s128
    %p139 = scmp.eq.s32.totalorder %s14, 0
    %p140 = por %p138, %p139
    %p141 = scmp.ne.s32.totalorder %s127, %s128
    %p142 = scmp.eq.s32.totalorder %s15, 7
    %p143 = por %p141, %p142
    %p145 = scmp.ne.s32.totalorder %s128, %s144
    %p146 = scmp.eq.s32.totalorder %s15, 0
    %p147 = por %p145, %p146
    %p148 = scmp.le.s32.totalorder 1, %s9
    %p149 = scmp.lt.s32.totalorder %s9, 9
    %p150 = pnand %p148, %p149
    %p151 = pneg %p150
    // Predicated region
    $region9: #{atrous_pyramid_pooling.2} parent=5 // pred_check
      _
    $region10: #{atrous_pyramid_pooling.2} parent=5 // pred_check_branch
      %153 = sbr.rel (%p150) target = $region12
    $region11: #{atrous_pyramid_pooling.2} parent=5 // pred_region
      %s154 = ssub.s32 %s9, 1
    $region12: #{atrous_pyramid_pooling.2} parent=5 // pred_fallthru
      _
    %p155 = scmp.lt.s32.totalorder %s9, 8
    // Predicated region
    $region13: #{atrous_pyramid_pooling.2} parent=5 // pred_check
      %p156 = pneg %p155
    $region14: #{atrous_pyramid_pooling.2} parent=5 // pred_check_branch
      %158 = sbr.rel (%p156) target = $region16
    $region15: #{atrous_pyramid_pooling.2} parent=5 // pred_region
      // Predicated region
      $region17: #{atrous_pyramid_pooling.2} parent=15 // pred_check
        %p159 = pneg %p48
      $region18: #{atrous_pyramid_pooling.2} parent=15 // pred_check_branch
        %161 = sbr.rel (%p159) target = $region20
      $region19: #{atrous_pyramid_pooling.2} parent=15 // pred_region
        %p162 = scmp.lt.s32.totalorder %s16, 3
        %s163 = scalar_select %p162, %s16, 3
        %s164 = smul.addr %s163, 4
        %s165 = smul.addr %s164, 4
        %s166 = scalar_lea.vmem %s0, %s165
      $region20: #{atrous_pyramid_pooling.2} parent=15 // pred_fallthru
        _
      // Predicated region
      $region21: #{atrous_pyramid_pooling.2} parent=15 // pred_check
        %p167 = pneg %p78
      $region22: #{atrous_pyramid_pooling.2} parent=15 // pred_check_branch
        %169 = sbr.rel (%p167) target = $region24
      $region23: #{atrous_pyramid_pooling.2} parent=15 // pred_region
        %s170 = smul.u32 2, %s18
        %p171 = scmp.lt.s32.totalorder %s16, 3
        %s172 = scalar_select %p171, %s16, 3
        %p173 = scmp.lt.s32.totalorder %s17, 1
        %s174 = scalar_select %p173, %s17, 1
        %p175 = scmp.lt.s32.totalorder %s170, 1
        %s176 = scalar_select %p175, %s170, 1
        %s177 = smul.addr %s174, 10
        %s178 = sadd.s32 %s176, %s177
        %s179 = smul.addr %s172, 20
        %s180 = sadd.s32 %s178, %s179
        %s181 = smul.addr %s180, 4
        %s182 = scalar_lea.vmem %s1, %s181
        %s183 = smul.u32 2, %s18
      $region24: #{atrous_pyramid_pooling.2} parent=15 // pred_fallthru
        _
      // Predicated region
      $region25: #{atrous_pyramid_pooling.2} parent=15 // pred_check
        %p184 = pneg %p104
      $region26: #{atrous_pyramid_pooling.2} parent=15 // pred_check_branch
        %186 = sbr.rel (%p184) target = $region28
      $region27: #{atrous_pyramid_pooling.2} parent=15 // pred_region
        %p187 = scmp.lt.s32.totalorder %s16, 3
        %s188 = scalar_select %p187, %s16, 3
        %s189 = smul.addr %s188, 4
        %s190 = smul.addr %s189, 8
        %s191 = scalar_lea.vmem %s2, %s190
      $region28: #{atrous_pyramid_pooling.2} parent=15 // pred_fallthru
        _
    $region16: #{atrous_pyramid_pooling.2} parent=5 // pred_fallthru
      _
    %p192 = scmp.le.s32.totalorder 1, %s9
    %p193 = scmp.lt.s32.totalorder %s9, 9
    %p194 = pnand %p192, %p193
    %p195 = pneg %p194
    // Predicated region
    $region29: #{atrous_pyramid_pooling.2} parent=5 // pred_check
      _
    $region30: #{atrous_pyramid_pooling.2} parent=5 // pred_check_branch
      %197 = sbr.rel (%p194) target = $region32
    $region31: #{atrous_pyramid_pooling.2} parent=5 // pred_region
      %s198 = ssub.s32 %s9, 1
      %p199 = scmp.lt.s32.totalorder %s19, 3
      %s200 = scalar_select %p199, %s19, 3
      %s201 = smul.addr %s200, 4
      %s202 = smul.addr %s201, 4
      %s203 = scalar_lea.vmem %s0, %s202
      %p204 = pneg %p54
      %p205 = pneg %p51
      %s206 = smul.u32 2, %s21
      %p207 = scmp.lt.s32.totalorder %s19, 3
      %s208 = scalar_select %p207, %s19, 3
      %p209 = scmp.lt.s32.totalorder %s20, 1
      %s210 = scalar_select %p209, %s20, 1
      %p211 = scmp.lt.s32.totalorder %s206, 1
      %s212 = scalar_select %p211, %s206, 1
      %s213 = smul.addr %s210, 10
      %s214 = sadd.s32 %s212, %s213
      %s215 = smul.addr %s208, 20
      %s216 = sadd.s32 %s214, %s215
      %s217 = smul.addr %s216, 4
      %s218 = scalar_lea.vmem %s1, %s217
      %p219 = pneg %p84
      %p220 = pneg %p81
      %p221 = scmp.lt.s32.totalorder %s19, 3
      %s222 = scalar_select %p221, %s19, 3
      %s223 = smul.addr %s222, 4
      %s224 = smul.addr %s223, 8
      %s225 = scalar_lea.vmem %s2, %s224
      %p226 = pneg %p110
      %p227 = pneg %p107
      %p228 = pneg %p140
      %p229 = pneg %p137
      %s230 = smul.u32 4, %s19
      %s231 = smul.u32 2, %s21
      %p232 = scmp.lt.s32.totalorder %s20, 1
      %s233 = scalar_select %p232, %s20, 1
      %p234 = scmp.lt.s32.totalorder %s230, 15
      %s235 = scalar_select %p234, %s230, 15
      %p236 = scmp.lt.s32.totalorder %s231, 1
      %s237 = scalar_select %p236, %s231, 1
      %s238 = smul.addr %s235, 2
      %s239 = sadd.s32 %s237, %s238
      %s240 = smul.addr %s233, 32
      %s241 = sadd.s32 %s239, %s240
      %s242 = smul.addr %s241, 4
      %s243 = scalar_lea.vmem %s3, %s242
      %p244 = scmp.lt.s32.totalorder %s19, 3
      %s245 = scalar_select %p244, %s19, 3
      %s246 = smul.addr %s245, 4
      %s247 = smul.addr %s246, 4
      %s248 = scalar_lea.vmem %s0, %s247
      %s249 = smul.u32 2, %s21
      %p250 = scmp.lt.s32.totalorder %s19, 3
      %s251 = scalar_select %p250, %s19, 3
      %p252 = scmp.lt.s32.totalorder %s20, 1
      %s253 = scalar_select %p252, %s20, 1
      %p254 = scmp.lt.s32.totalorder %s249, 1
      %s255 = scalar_select %p254, %s249, 1
      %s256 = smul.addr %s253, 10
      %s257 = sadd.s32 %s255, %s256
      %s258 = smul.addr %s251, 20
      %s259 = sadd.s32 %s257, %s258
      %s260 = smul.addr %s259, 4
      %s261 = scalar_lea.vmem %s1, %s260
      %s262 = smul.u32 2, %s21
      %p263 = scmp.lt.s32.totalorder %s19, 3
      %s264 = scalar_select %p263, %s19, 3
      %s265 = smul.addr %s264, 4
      %s266 = smul.addr %s265, 8
      %s267 = scalar_lea.vmem %s2, %s266
      %s268 = smul.u32 4, %s19
      %s269 = smul.u32 2, %s21
      %p270 = scmp.lt.s32.totalorder %s20, 1
      %s271 = scalar_select %p270, %s20, 1
      %p272 = scmp.lt.s32.totalorder %s268, 15
      %s273 = scalar_select %p272, %s268, 15
      %p274 = scmp.lt.s32.totalorder %s269, 1
      %s275 = scalar_select %p274, %s269, 1
      %s276 = smul.addr %s273, 2
      %s277 = sadd.s32 %s275, %s276
      %s278 = smul.addr %s271, 32
      %s279 = sadd.s32 %s277, %s278
      %s280 = smul.addr %s279, 4
      %s281 = scalar_lea.vmem %s3, %s280
      %s282 = smul.u32 4, %s19
      %s283 = smul.u32 2, %s21
      %v285 = vld [vmem:[%s248] sm:$0xf]
      %v286 = vld [vmem:[%s248 + $0x4] sm:$0xf]
      %v287 = vld [vmem:[%s248 + $0x8] sm:$0xf]
      %v288 = vld [vmem:[%s248 + $0xc] sm:$0xf]
      %v289 = vld [vmem:[%s261] sm:$0xff]
      %v290 = vld [vmem:[%s261 + $0x8] sm:$0xff]
      %v291 = vld [vmem:[%s261 + $0x10] sm:$0xff]
      %v292 = vld [vmem:[%s261 + $0x18] sm:$0xff]
      %v293 = vld [vmem:[%s261 + $0x20] sm:$0x33]
      %v294 = vld [vmem:[%s267] sm:$0xff]
      %v295 = vld [vmem:[%s267 + $0x8] sm:$0xff]
      %v296 = vld [vmem:[%s267 + $0x10] sm:$0xff]
      %v297 = vld [vmem:[%s267 + $0x18] sm:$0xff]
      %299 = vset.pattern.permute.xlu0 0
      %300 = vperm.xlu0 %299, %v294
      %v301 = vpop.permute.xlu0 %300
      %304 = vset.pattern.permute.xlu0 0
      %305 = vperm.xlu0 %304, %v295
      %v306 = vpop.permute.xlu0 %305
      %309 = vset.pattern.permute.xlu0 0
      %310 = vperm.xlu0 %309, %v296
      %v311 = vpop.permute.xlu0 %310
      %314 = vset.pattern.permute.xlu0 0
      %315 = vperm.xlu0 %314, %v297
      %v316 = vpop.permute.xlu0 %315
      %v322 = vunpack.c.l.b16 %v285
      %v323 = vunpack.c.l.b16 %v286
      %v324 = vunpack.c.l.b16 %v287
      %v325 = vunpack.c.l.b16 %v288
      %v326 = vpack.c.b16 %v323, %v322
      %v327 = vpack.c.b16 %v325, %v324
      %v333 = vunpack.c.l.b16 %v289
      %v334 = vunpack.c.h.b16 %v289
      %v335 = vunpack.c.l.b16 %v290
      %v336 = vunpack.c.h.b16 %v290
      %v337 = vunpack.c.l.b16 %v291
      %v338 = vunpack.c.h.b16 %v291
      %v339 = vunpack.c.l.b16 %v292
      %v340 = vunpack.c.h.b16 %v292
      %v341 = vunpack.c.l.b16 %v293
      %v342 = vunpack.c.h.b16 %v293
      %v343 = vpack.c.b16 %v335, %v333
      %v344 = vpack.c.b16 %v336, %v334
      %v345 = vpack.c.b16 %v339, %v337
      %v346 = vpack.c.b16 %v340, %v338
      %v347 = vpack.c.b16 %v341, %v341
      %v348 = vpack.c.b16 %v342, %v342
      %vm353 = vcmask 293888
      %v355 = vsel %vm353, %v326, 0
      %v358 = vsel %vm353, %v327, 0
      %vm360 = vcmask 1041408
      %v362 = vsel %vm360, %v347, 0
      %v365 = vsel %vm360, %v348, 0
      %367 = vmatprep.subr.bf16.mxu0 %v344
      %368 = vmatpush1.bf16.msra.mxu0 %v343
      %369 = vmatprep.subr.bf16.mxu0 %v346
      %370 = vmatpush1.bf16.msra.mxu0 %v345
      %371 = vmatprep.subr.bf16.mxu0 %v365
      %372 = vmatpush1.bf16.msra.mxu0 %v362
      %373 = vmatprep.subr.bf16.mxu0 0
      %374 = vmatpush1.bf16.msra.mxu0 0
      %375 = vmatprep.subr.bf16.mxu0 0
      %376 = vmatpush1.bf16.msra.mxu0 0
      %377 = vmatprep.subr.bf16.mxu0 0
      %378 = vmatpush1.bf16.msra.mxu0 0
      %379 = vmatprep.subr.bf16.mxu0 0
      %380 = vmatpush1.bf16.msra.mxu0 0
      %381 = vmatprep.subr.bf16.mxu0 0
      %382 = vmatpush1.bf16.msra.mxu0 0
      %383 = vmatprep.subr.bf16.mxu0 0
      %384 = vmatpush1.bf16.msra.mxu0 0
      %385 = vmatprep.subr.bf16.mxu0 0
      %386 = vmatpush1.bf16.msra.mxu0 0
      %387 = vmatprep.subr.bf16.mxu0 0
      %388 = vmatpush1.bf16.msra.mxu0 0
      %389 = vmatprep.subr.bf16.mxu0 0
      %390 = vmatpush1.bf16.msra.mxu0 0
      %391 = vmatprep.subr.bf16.mxu0 0
      %392 = vmatpush1.bf16.msra.mxu0 0
      %393 = vmatprep.subr.bf16.mxu0 0
      %394 = vmatpush1.bf16.msra.mxu0 0
      %395 = vmatprep.subr.bf16.mxu0 0
      %396 = vmatpush1.bf16.msra.mxu0 0
      %397 = vmatprep.subr.bf16.mxu0 0
      %398 = vmatpush1.bf16.msra.mxu0 0
      %399 = vmatprep.mubr.bf16.mxu0 0
      %400 = vmatmul.mubr.bf16.gmra.mrb[0].mxu0 %v355
      %v401 = vpop.f32.mrb[0].mxu0
      %v402 = vadd.f32 %v301, %v401
      %v403 = vpop.f32.mrb[0].mxu0
      %v404 = vadd.f32 %v301, %v403
      %v405 = vpop.f32.mrb[0].mxu0
      %v406 = vadd.f32 %v306, %v405
      %v407 = vpop.f32.mrb[0].mxu0
      %v408 = vadd.f32 %v306, %v407
      %409 = vmatprep.mubr.bf16.mxu0 0
      %410 = vmatmul.mubr.bf16.gmra.mrb[0].mxu0 %v358
      %v411 = vpop.f32.mrb[0].mxu0
      %v412 = vadd.f32 %v311, %v411
      %v413 = vpop.f32.mrb[0].mxu0
      %v414 = vadd.f32 %v311, %v413
      %v415 = vpop.f32.mrb[0].mxu0
      %v416 = vadd.f32 %v316, %v415
      %v417 = vpop.f32.mrb[0].mxu0
      %v418 = vadd.f32 %v316, %v417
      %419 = vdwg.mxu0
      %v420 = vmax.f32 %v402, 0.0
      %v421 = vmax.f32 %v404, 0.0
      %v422 = vmax.f32 %v406, 0.0
      %v423 = vmax.f32 %v408, 0.0
      %v424 = vmax.f32 %v412, 0.0
      %v425 = vmax.f32 %v414, 0.0
      %v426 = vmax.f32 %v416, 0.0
      %v427 = vmax.f32 %v418, 0.0
      %v428 = vpack.c.bf16 %v422, %v420
      %v429 = vpack.c.bf16 %v423, %v421
      %v430 = vpack.c.bf16 %v426, %v424
      %v431 = vpack.c.bf16 %v427, %v425
      %v436 = vunpack.c.l.b16 %v428
      %v437 = vunpack.c.l.b16 %v429
      %v438 = vunpack.c.h.b16 %v428
      %v439 = vunpack.c.h.b16 %v429
      %v440 = vunpack.c.l.b16 %v430
      %v441 = vunpack.c.l.b16 %v431
      %v442 = vunpack.c.h.b16 %v430
      %v443 = vunpack.c.h.b16 %v431
      %v444 = vpack.c.b16 %v437, %v436
      %v445 = vpack.c.b16 %v439, %v438
      %v446 = vpack.c.b16 %v441, %v440
      %v447 = vpack.c.b16 %v443, %v442
      %452 = vst [vmem:[%s281] sm:$0xff] %v444
      %453 = vst [vmem:[%s281 + $0x8] sm:$0xff] %v445
      %454 = vst [vmem:[%s281 + $0x10] sm:$0xff] %v446
      %455 = vst [vmem:[%s281 + $0x18] sm:$0xff] %v447
      %s456 = smul.u32 4, %s19
      %s457 = smul.u32 2, %s21
      %p458 = scmp.lt.s32.totalorder %s20, 1
      %s459 = scalar_select %p458, %s20, 1
      %p460 = scmp.lt.s32.totalorder %s456, 15
      %s461 = scalar_select %p460, %s456, 15
      %p462 = scmp.lt.s32.totalorder %s457, 1
      %s463 = scalar_select %p462, %s457, 1
      %s464 = smul.addr %s461, 2
      %s465 = sadd.s32 %s463, %s464
      %s466 = smul.addr %s459, 32
      %s467 = sadd.s32 %s465, %s466
      %s468 = smul.addr %s467, 4
      %s469 = scalar_lea.vmem %s3, %s468
      // Predicated region
      $region33: #{atrous_pyramid_pooling.2} parent=31 // pred_check
        %p470 = pneg %p137
      $region34: #{atrous_pyramid_pooling.2} parent=31 // pred_check_branch
        %472 = sbr.rel (%p470) target = $region36
      $region35: #{atrous_pyramid_pooling.2} parent=31 // pred_region
        %s473 = smul.u32 4, %s19
        %s474 = smul.u32 2, %s21
      $region36: #{atrous_pyramid_pooling.2} parent=31 // pred_fallthru
        _
    $region32: #{atrous_pyramid_pooling.2} parent=5 // pred_fallthru
      _
    %p475 = scmp.le.s32.totalorder 2, %s9
    // Predicated region
    $region37: #{atrous_pyramid_pooling.2} parent=5 // pred_check
      %p476 = pneg %p475
    $region38: #{atrous_pyramid_pooling.2} parent=5 // pred_check_branch
      %478 = sbr.rel (%p476) target = $region40
    $region39: #{atrous_pyramid_pooling.2} parent=5 // pred_region
      %s479 = ssub.s32 %s9, 2
      // Predicated region
      $region41: #{atrous_pyramid_pooling.2} parent=39 // pred_check
        %p480 = pneg %p143
      $region42: #{atrous_pyramid_pooling.2} parent=39 // pred_check_branch
        %482 = sbr.rel (%p480) target = $region44
      $region43: #{atrous_pyramid_pooling.2} parent=39 // pred_region
        %s483 = smul.u32 4, %s22
        %s484 = smul.u32 2, %s24
        %p485 = scmp.lt.s32.totalorder %s23, 1
        %s486 = scalar_select %p485, %s23, 1
        %p487 = scmp.lt.s32.totalorder %s483, 15
        %s488 = scalar_select %p487, %s483, 15
        %p489 = scmp.lt.s32.totalorder %s484, 1
        %s490 = scalar_select %p489, %s484, 1
        %s491 = smul.addr %s488, 2
        %s492 = sadd.s32 %s490, %s491
        %s493 = smul.addr %s486, 32
        %s494 = sadd.s32 %s492, %s493
        %s495 = smul.addr %s494, 4
        %s496 = scalar_lea.vmem %s3, %s495
      $region44: #{atrous_pyramid_pooling.2} parent=39 // pred_fallthru
        _
    $region40: #{atrous_pyramid_pooling.2} parent=5 // pred_fallthru
      _
  $region6: #{atrous_pyramid_pooling.2} parent=0 // loop_footer
    %s13 = sadd.s32 1, %s9
  $region7: #{atrous_pyramid_pooling.2} parent=0 // loop_footer_branch
    %8 = sbr.rel target = $region3
  $region8: #{atrous_pyramid_pooling.2} parent=0 // loop_exit
    _

// kernel: atrous_pyramid_pooling.3
$region0: #{atrous_pyramid_pooling.3}
  #allocation0 [shape = 'u32[]', space=smem, size = 0x4, offset = 0x4, fixed_abs, tag = 'smem constant byte address 0x4 - core index']
  #allocation1 [shape = 'u32[144,128]{1,0:T(1,128)}', space=vmem, size = 0x12000, scoped, tag = 'internal scratch']
  %s0 = inlined_call_operand.vmem [shape: bf16[32,128], index: 0, kind: input, shape index: {}]
  %s1 = inlined_call_operand.vmem [shape: bf16[2,128,256], index: 1, kind: input, shape index: {}]
  %s2 = inlined_call_operand.vmem [shape: f32[2,32,1], index: 2, kind: input, shape index: {}]
  %s3 = inlined_call_operand.vmem [shape: f32[2,32,256], index: 3, kind: output, shape index: {}]
  %s4 = sld [smem:[#allocation0]]
  $region45: #{atrous_pyramid_pooling.3} parent=0
    _
  %s6 = ssub.s32 1, %s4
  %s7 = scalar_select 0, %s6, %s4
  loop: start=0, step=1, limit=4
  $region2: #{atrous_pyramid_pooling.3} parent=0 // loop_pre_header
    _
  $region3: #{atrous_pyramid_pooling.3} parent=0 // loop_header
    %s9 = sphi 0, %s13
    %p10 = scmp.ge.s32.totalorder %s9, 4
    %s16 = sphi 0, %s28
    %s17 = sphi 0, %s24
    %s18 = sphi 0, %s16
    %s19 = sphi 0, %s17
    %s20 = sphi 0, %s18
    %s21 = sphi 0, %s19
    %s29 = sphi 0, %s29
    %s31 = sphi 0, %s29
    %s32 = sphi 0, %s31
    %s46 = sphi 0, %s32
    %s54 = sphi 0, %s56
    %s57 = sphi 0, %s54
    %s58 = sphi 0, %s57
    %s74 = sphi 0, %s58
    %s80 = sphi 0, %s82
    %s83 = sphi 0, %s80
    %s84 = sphi 0, %s83
    %s100 = sphi 0, %s84
    %s108 = sphi 0, %s110
    %s111 = sphi 0, %s108
    %s112 = sphi 0, %s111
    %s128 = sphi 0, %s112
  $region4: #{atrous_pyramid_pooling.3} parent=0 // loop_header_branch
    %12 = sbr.rel (%p10) target = $region8
  $region5: #{atrous_pyramid_pooling.3} parent=0 // loop_body
    %s14 = ssub.s32 %s9, 1
    %s15 = ssub.s32 %s9, 2
    %s22 = sadd.s32 1, %s17
    %p23 = scmp.ge.s32.totalorder %s22, 1
    %s24 = scalar_select %p23, 0, %s22
    %s25 = sadd.s32 1, %s16
    %s26 = scalar_select %p23, %s25, %s16
    %p27 = scmp.ge.s32.totalorder %s26, 2
    %s28 = scalar_select %p27, 0, %s26
    %s30 = sadd.s32 %s29, 1
    %p33 = scmp.eq.s32.totalorder %s9, 1
    %p34 = scmp.ne.s32.totalorder %s29, %s31
    %p35 = scmp.eq.s32.totalorder %s9, 0
    %p36 = por %p34, %p35
    %p37 = scmp.ne.s32.totalorder %s29, %s31
    %p38 = scmp.eq.s32.totalorder %s14, 1
    %p39 = por %p37, %p38
    %p40 = scmp.ne.s32.totalorder %s31, %s32
    %p41 = scmp.eq.s32.totalorder %s14, 0
    %p42 = por %p40, %p41
    %p43 = scmp.ne.s32.totalorder %s31, %s32
    %p44 = scmp.eq.s32.totalorder %s15, 1
    %p45 = por %p43, %p44
    %p47 = scmp.ne.s32.totalorder %s32, %s46
    %p48 = scmp.eq.s32.totalorder %s15, 0
    %p49 = por %p47, %p48
    %s50 = ssub.s32 %s16, %s28
    %s51 = ssub.s32 %s17, %s24
    %s52 = sor.u32 %s50, %s51
    %p53 = scmp.eq.s32.totalorder %s52, 0
    %s55 = sadd.s32 %s54, 1
    %s56 = scalar_select %p53, %s54, %s55
    %p59 = pneg %p53
    %p60 = scmp.eq.s32.totalorder %s9, 1
    %p61 = por %p59, %p60
    %p62 = scmp.ne.s32.totalorder %s54, %s57
    %p63 = scmp.eq.s32.totalorder %s9, 0
    %p64 = por %p62, %p63
    %p65 = scmp.ne.s32.totalorder %s54, %s57
    %p66 = scmp.eq.s32.totalorder %s14, 1
    %p67 = por %p65, %p66
    %p68 = scmp.ne.s32.totalorder %s57, %s58
    %p69 = scmp.eq.s32.totalorder %s14, 0
    %p70 = por %p68, %p69
    %p71 = scmp.ne.s32.totalorder %s57, %s58
    %p72 = scmp.eq.s32.totalorder %s15, 1
    %p73 = por %p71, %p72
    %p75 = scmp.ne.s32.totalorder %s58, %s74
    %p76 = scmp.eq.s32.totalorder %s15, 0
    %p77 = por %p75, %p76
    %s78 = ssub.s32 %s16, %s28
    %p79 = scmp.eq.s32.totalorder %s78, 0
    %s81 = sadd.s32 %s80, 1
    %s82 = scalar_select %p79, %s80, %s81
    %p85 = pneg %p79
    %p86 = scmp.eq.s32.totalorder %s9, 1
    %p87 = por %p85, %p86
    %p88 = scmp.ne.s32.totalorder %s80, %s83
    %p89 = scmp.eq.s32.totalorder %s9, 0
    %p90 = por %p88, %p89
    %p91 = scmp.ne.s32.totalorder %s80, %s83
    %p92 = scmp.eq.s32.totalorder %s14, 1
    %p93 = por %p91, %p92
    %p94 = scmp.ne.s32.totalorder %s83, %s84
    %p95 = scmp.eq.s32.totalorder %s14, 0
    %p96 = por %p94, %p95
    %p97 = scmp.ne.s32.totalorder %s83, %s84
    %p98 = scmp.eq.s32.totalorder %s15, 1
    %p99 = por %p97, %p98
    %p101 = scmp.ne.s32.totalorder %s84, %s100
    %p102 = scmp.eq.s32.totalorder %s15, 0
    %p103 = por %p101, %p102
    %s104 = ssub.s32 %s16, %s28
    %s105 = ssub.s32 %s17, %s24
    %s106 = sor.u32 %s104, %s105
    %p107 = scmp.eq.s32.totalorder %s106, 0
    %s109 = sadd.s32 %s108, 1
    %s110 = scalar_select %p107, %s108, %s109
    %p113 = pneg %p107
    %p114 = scmp.eq.s32.totalorder %s9, 1
    %p115 = por %p113, %p114
    %p116 = scmp.ne.s32.totalorder %s108, %s111
    %p117 = scmp.eq.s32.totalorder %s9, 0
    %p118 = por %p116, %p117
    %p119 = scmp.ne.s32.totalorder %s108, %s111
    %p120 = scmp.eq.s32.totalorder %s14, 1
    %p121 = por %p119, %p120
    %p122 = scmp.ne.s32.totalorder %s111, %s112
    %p123 = scmp.eq.s32.totalorder %s14, 0
    %p124 = por %p122, %p123
    %p125 = scmp.ne.s32.totalorder %s111, %s112
    %p126 = scmp.eq.s32.totalorder %s15, 1
    %p127 = por %p125, %p126
    %p129 = scmp.ne.s32.totalorder %s112, %s128
    %p130 = scmp.eq.s32.totalorder %s15, 0
    %p131 = por %p129, %p130
    %p132 = scmp.le.s32.totalorder 1, %s9
    %p133 = scmp.lt.s32.totalorder %s9, 3
    %p134 = pnand %p132, %p133
    %p135 = pneg %p134
    // Predicated region
    $region9: #{atrous_pyramid_pooling.3} parent=5 // pred_check
      _
    $region10: #{atrous_pyramid_pooling.3} parent=5 // pred_check_branch
      %137 = sbr.rel (%p134) target = $region12
    $region11: #{atrous_pyramid_pooling.3} parent=5 // pred_region
      %s138 = ssub.s32 %s9, 1
      // Predicated region
      $region13: #{atrous_pyramid_pooling.3} parent=11 // pred_check
        %p139 = pneg %p42
      $region14: #{atrous_pyramid_pooling.3} parent=11 // pred_check_branch
        %141 = sbr.rel (%p139) target = $region16
      $region15: #{atrous_pyramid_pooling.3} parent=11 // pred_region
        _
      $region16: #{atrous_pyramid_pooling.3} parent=11 // pred_fallthru
        _
    $region12: #{atrous_pyramid_pooling.3} parent=5 // pred_fallthru
      _
    %p142 = scmp.lt.s32.totalorder %s9, 2
    // Predicated region
    $region17: #{atrous_pyramid_pooling.3} parent=5 // pred_check
      %p143 = pneg %p142
    $region18: #{atrous_pyramid_pooling.3} parent=5 // pred_check_branch
      %145 = sbr.rel (%p143) target = $region20
    $region19: #{atrous_pyramid_pooling.3} parent=5 // pred_region
      // Predicated region
      $region21: #{atrous_pyramid_pooling.3} parent=19 // pred_check
        %p146 = pneg %p64
      $region22: #{atrous_pyramid_pooling.3} parent=19 // pred_check_branch
        %148 = sbr.rel (%p146) target = $region24
      $region23: #{atrous_pyramid_pooling.3} parent=19 // pred_region
        %s149 = smul.u32 2, %s17
        %p150 = scmp.lt.s32.totalorder %s16, 1
        %s151 = scalar_select %p150, %s16, 1
        %p152 = scmp.lt.s32.totalorder %s149, 1
        %s153 = scalar_select %p152, %s149, 1
        %s154 = smul.addr %s151, 32
        %s155 = sadd.s32 %s153, %s154
        %s156 = smul.addr %s155, 4
        %s157 = scalar_lea.vmem %s1, %s156
        %s158 = smul.u32 2, %s17
      $region24: #{atrous_pyramid_pooling.3} parent=19 // pred_fallthru
        _
      // Predicated region
      $region25: #{atrous_pyramid_pooling.3} parent=19 // pred_check
        %p159 = pneg %p90
      $region26: #{atrous_pyramid_pooling.3} parent=19 // pred_check_branch
        %161 = sbr.rel (%p159) target = $region28
      $region27: #{atrous_pyramid_pooling.3} parent=19 // pred_region
        %p162 = scmp.lt.s32.totalorder %s16, 1
        %s163 = scalar_select %p162, %s16, 1
        %s164 = smul.addr %s163, 4
        %s165 = smul.addr %s164, 8
        %s166 = scalar_lea.vmem %s2, %s165
      $region28: #{atrous_pyramid_pooling.3} parent=19 // pred_fallthru
        _
    $region20: #{atrous_pyramid_pooling.3} parent=5 // pred_fallthru
      _
    %p167 = scmp.le.s32.totalorder 1, %s9
    %p168 = scmp.lt.s32.totalorder %s9, 3
    %p169 = pnand %p167, %p168
    %p170 = pneg %p169
    // Predicated region
    $region29: #{atrous_pyramid_pooling.3} parent=5 // pred_check
      _
    $region30: #{atrous_pyramid_pooling.3} parent=5 // pred_check_branch
      %172 = sbr.rel (%p169) target = $region32
    $region31: #{atrous_pyramid_pooling.3} parent=5 // pred_region
      %s173 = ssub.s32 %s9, 1
      %p174 = pneg %p42
      %p175 = pneg %p39
      %s176 = smul.u32 2, %s19
      %p177 = scmp.lt.s32.totalorder %s18, 1
      %s178 = scalar_select %p177, %s18, 1
      %p179 = scmp.lt.s32.totalorder %s176, 1
      %s180 = scalar_select %p179, %s176, 1
      %s181 = smul.addr %s178, 32
      %s182 = sadd.s32 %s180, %s181
      %s183 = smul.addr %s182, 4
      %s184 = scalar_lea.vmem %s1, %s183
      %p185 = pneg %p70
      %p186 = pneg %p67
      %p187 = scmp.lt.s32.totalorder %s18, 1
      %s188 = scalar_select %p187, %s18, 1
      %s189 = smul.addr %s188, 4
      %s190 = smul.addr %s189, 8
      %s191 = scalar_lea.vmem %s2, %s190
      %p192 = pneg %p96
      %p193 = pneg %p93
      %p194 = pneg %p124
      %p195 = pneg %p121
      %s196 = smul.u32 2, %s19
      %p197 = scmp.lt.s32.totalorder %s18, 1
      %s198 = scalar_select %p197, %s18, 1
      %p199 = scmp.lt.s32.totalorder %s196, 1
      %s200 = scalar_select %p199, %s196, 1
      %s201 = smul.addr %s198, 8
      %s202 = sadd.s32 %s200, %s201
      %s203 = smul.addr %s202, 8
      %s204 = scalar_lea.vmem %s3, %s203
      %s205 = smul.u32 2, %s19
      %p206 = scmp.lt.s32.totalorder %s18, 1
      %s207 = scalar_select %p206, %s18, 1
      %p208 = scmp.lt.s32.totalorder %s205, 1
      %s209 = scalar_select %p208, %s205, 1
      %s210 = smul.addr %s207, 32
      %s211 = sadd.s32 %s209, %s210
      %s212 = smul.addr %s211, 4
      %s213 = scalar_lea.vmem %s1, %s212
      %s214 = smul.u32 2, %s19
      %p215 = scmp.lt.s32.totalorder %s18, 1
      %s216 = scalar_select %p215, %s18, 1
      %s217 = smul.addr %s216, 4
      %s218 = smul.addr %s217, 8
      %s219 = scalar_lea.vmem %s2, %s218
      %s220 = smul.u32 2, %s19
      %p221 = scmp.lt.s32.totalorder %s18, 1
      %s222 = scalar_select %p221, %s18, 1
      %p223 = scmp.lt.s32.totalorder %s220, 1
      %s224 = scalar_select %p223, %s220, 1
      %s225 = smul.addr %s222, 8
      %s226 = sadd.s32 %s224, %s225
      %s227 = smul.addr %s226, 8
      %s228 = scalar_lea.vmem %s3, %s227
      %s229 = smul.u32 2, %s19
      %v231 = vld [vmem:[%s0] sm:$0xf]
      %v232 = vld [vmem:[%s0 + $0x4] sm:$0xf]
      %v233 = vld [vmem:[%s0 + $0x8] sm:$0xf]
      %v234 = vld [vmem:[%s0 + $0xc] sm:$0xf]
      %v235 = vld [vmem:[%s213] sm:$0xff]
      %v236 = vld [vmem:[%s213 + $0x8] sm:$0xff]
      %v237 = vld [vmem:[%s213 + $0x10] sm:$0xff]
      %v238 = vld [vmem:[%s213 + $0x18] sm:$0xff]
      %v239 = vld [vmem:[%s213 + $0x20] sm:$0xff]
      %v240 = vld [vmem:[%s213 + $0x28] sm:$0xff]
      %v241 = vld [vmem:[%s213 + $0x30] sm:$0xff]
      %v242 = vld [vmem:[%s213 + $0x38] sm:$0xff]
      %v243 = vld [vmem:[%s213 + $0x40] sm:$0xff]
      %v244 = vld [vmem:[%s213 + $0x48] sm:$0xff]
      %v245 = vld [vmem:[%s213 + $0x50] sm:$0xff]
      %v246 = vld [vmem:[%s213 + $0x58] sm:$0xff]
      %v247 = vld [vmem:[%s213 + $0x60] sm:$0xff]
      %v248 = vld [vmem:[%s213 + $0x68] sm:$0xff]
      %v249 = vld [vmem:[%s213 + $0x70] sm:$0xff]
      %v250 = vld [vmem:[%s213 + $0x78] sm:$0xff]
      %v251 = vld [vmem:[%s219] sm:$0xff]
      %v252 = vld [vmem:[%s219 + $0x8] sm:$0xff]
      %v253 = vld [vmem:[%s219 + $0x10] sm:$0xff]
      %v254 = vld [vmem:[%s219 + $0x18] sm:$0xff]
      %256 = vset.pattern.permute.xlu0 0
      %257 = vperm.xlu0 %256, %v251
      %v258 = vpop.permute.xlu0 %257
      %261 = vset.pattern.permute.xlu0 0
      %262 = vperm.xlu0 %261, %v252
      %v263 = vpop.permute.xlu0 %262
      %266 = vset.pattern.permute.xlu0 0
      %267 = vperm.xlu0 %266, %v253
      %v268 = vpop.permute.xlu0 %267
      %271 = vset.pattern.permute.xlu0 0
      %272 = vperm.xlu0 %271, %v254
      %v273 = vpop.permute.xlu0 %272
      %v279 = vunpack.c.l.b16 %v231
      %v280 = vunpack.c.l.b16 %v232
      %v281 = vunpack.c.l.b16 %v233
      %v282 = vunpack.c.l.b16 %v234
      %v283 = vpack.c.b16 %v280, %v279
      %v284 = vpack.c.b16 %v282, %v281
      %v303 = vunpack.c.l.b16 %v235
      %v304 = vunpack.c.h.b16 %v235
      %v305 = vunpack.c.l.b16 %v236
      %v306 = vunpack.c.h.b16 %v236
      %v307 = vunpack.c.l.b16 %v237
      %v308 = vunpack.c.h.b16 %v237
      %v309 = vunpack.c.l.b16 %v238
      %v310 = vunpack.c.h.b16 %v238
      %v311 = vunpack.c.l.b16 %v239
      %v312 = vunpack.c.h.b16 %v239
      %v313 = vunpack.c.l.b16 %v240
      %v314 = vunpack.c.h.b16 %v240
      %v315 = vunpack.c.l.b16 %v241
      %v316 = vunpack.c.h.b16 %v241
      %v317 = vunpack.c.l.b16 %v242
      %v318 = vunpack.c.h.b16 %v242
      %v319 = vunpack.c.l.b16 %v243
      %v320 = vunpack.c.h.b16 %v243
      %v321 = vunpack.c.l.b16 %v244
      %v322 = vunpack.c.h.b16 %v244
      %v323 = vunpack.c.l.b16 %v245
      %v324 = vunpack.c.h.b16 %v245
      %v325 = vunpack.c.l.b16 %v246
      %v326 = vunpack.c.h.b16 %v246
      %v327 = vunpack.c.l.b16 %v247
      %v328 = vunpack.c.h.b16 %v247
      %v329 = vunpack.c.l.b16 %v248
      %v330 = vunpack.c.h.b16 %v248
      %v331 = vunpack.c.l.b16 %v249
      %v332 = vunpack.c.h.b16 %v249
      %v333 = vunpack.c.l.b16 %v250
      %v334 = vunpack.c.h.b16 %v250
      %v335 = vpack.c.b16 %v305, %v303
      %v336 = vpack.c.b16 %v306, %v304
      %v337 = vpack.c.b16 %v309, %v307
      %v338 = vpack.c.b16 %v310, %v308
      %v339 = vpack.c.b16 %v313, %v311
      %v340 = vpack.c.b16 %v314, %v312
      %v341 = vpack.c.b16 %v317, %v315
      %v342 = vpack.c.b16 %v318, %v316
      %v343 = vpack.c.b16 %v321, %v319
      %v344 = vpack.c.b16 %v322, %v320
      %v345 = vpack.c.b16 %v325, %v323
      %v346 = vpack.c.b16 %v326, %v324
      %v347 = vpack.c.b16 %v329, %v327
      %v348 = vpack.c.b16 %v330, %v328
      %v349 = vpack.c.b16 %v333, %v331
      %v350 = vpack.c.b16 %v334, %v332
      %367 = vmatprep.subr.bf16.mxu0 %v336
      %368 = vmatpush1.bf16.msra.mxu0 %v335
      %369 = vmatprep.subr.bf16.mxu0 %v338
      %370 = vmatpush1.bf16.msra.mxu0 %v337
      %371 = vmatprep.subr.bf16.mxu0 %v340
      %372 = vmatpush1.bf16.msra.mxu0 %v339
      %373 = vmatprep.subr.bf16.mxu0 %v342
      %374 = vmatpush1.bf16.msra.mxu0 %v341
      %375 = vmatprep.subr.bf16.mxu0 %v344
      %376 = vmatpush1.bf16.msra.mxu0 %v343
      %377 = vmatprep.subr.bf16.mxu0 %v346
      %378 = vmatpush1.bf16.msra.mxu0 %v345
      %379 = vmatprep.subr.bf16.mxu0 %v348
      %380 = vmatpush1.bf16.msra.mxu0 %v347
      %381 = vmatprep.subr.bf16.mxu0 %v350
      %382 = vmatpush1.bf16.msra.mxu0 %v349
      %383 = vmatprep.subr.bf16.mxu0 0
      %384 = vmatpush1.bf16.msra.mxu0 0
      %385 = vmatprep.subr.bf16.mxu0 0
      %386 = vmatpush1.bf16.msra.mxu0 0
      %387 = vmatprep.subr.bf16.mxu0 0
      %388 = vmatpush1.bf16.msra.mxu0 0
      %389 = vmatprep.subr.bf16.mxu0 0
      %390 = vmatpush1.bf16.msra.mxu0 0
      %391 = vmatprep.subr.bf16.mxu0 0
      %392 = vmatpush1.bf16.msra.mxu0 0
      %393 = vmatprep.subr.bf16.mxu0 0
      %394 = vmatpush1.bf16.msra.mxu0 0
      %395 = vmatprep.subr.bf16.mxu0 0
      %396 = vmatpush1.bf16.msra.mxu0 0
      %397 = vmatprep.subr.bf16.mxu0 0
      %398 = vmatpush1.bf16.msra.mxu0 0
      %399 = vmatprep.mubr.bf16.mxu0 0
      %400 = vmatmul.mubr.bf16.gmra.mrb[0].mxu0 %v283
      %v401 = vpop.f32.mrb[0].mxu0
      %v402 = vadd.f32 %v258, %v401
      %v403 = vpop.f32.mrb[0].mxu0
      %v404 = vadd.f32 %v258, %v403
      %v405 = vpop.f32.mrb[0].mxu0
      %v406 = vadd.f32 %v263, %v405
      %v407 = vpop.f32.mrb[0].mxu0
      %v408 = vadd.f32 %v263, %v407
      %409 = vmatprep.mubr.bf16.mxu0 0
      %410 = vmatmul.mubr.bf16.gmra.mrb[0].mxu0 %v284
      %v411 = vpop.f32.mrb[0].mxu0
      %v412 = vadd.f32 %v268, %v411
      %v413 = vpop.f32.mrb[0].mxu0
      %v414 = vadd.f32 %v268, %v413
      %v415 = vpop.f32.mrb[0].mxu0
      %v416 = vadd.f32 %v273, %v415
      %v417 = vpop.f32.mrb[0].mxu0
      %v418 = vadd.f32 %v273, %v417
      %419 = vdwg.mxu0
      %v420 = vmax.f32 %v402, 0.0
      %v421 = vmax.f32 %v404, 0.0
      %v422 = vmax.f32 %v406, 0.0
      %v423 = vmax.f32 %v408, 0.0
      %v424 = vmax.f32 %v412, 0.0
      %v425 = vmax.f32 %v414, 0.0
      %v426 = vmax.f32 %v416, 0.0
      %v427 = vmax.f32 %v418, 0.0
      %428 = vst [vmem:[%s228] sm:$0xff] %v420
      %429 = vst [vmem:[%s228 + $0x8] sm:$0xff] %v421
      %430 = vst [vmem:[%s228 + $0x10] sm:$0xff] %v422
      %431 = vst [vmem:[%s228 + $0x18] sm:$0xff] %v423
      %432 = vst [vmem:[%s228 + $0x20] sm:$0xff] %v424
      %433 = vst [vmem:[%s228 + $0x28] sm:$0xff] %v425
      %434 = vst [vmem:[%s228 + $0x30] sm:$0xff] %v426
      %435 = vst [vmem:[%s228 + $0x38] sm:$0xff] %v427
      %s436 = smul.u32 2, %s19
      %p437 = scmp.lt.s32.totalorder %s18, 1
      %s438 = scalar_select %p437, %s18, 1
      %p439 = scmp.lt.s32.totalorder %s436, 1
      %s440 = scalar_select %p439, %s436, 1
      %s441 = smul.addr %s438, 8
      %s442 = sadd.s32 %s440, %s441
      %s443 = smul.addr %s442, 8
      %s444 = scalar_lea.vmem %s3, %s443
      // Predicated region
      $region33: #{atrous_pyramid_pooling.3} parent=31 // pred_check
        %p445 = pneg %p121
      $region34: #{atrous_pyramid_pooling.3} parent=31 // pred_check_branch
        %447 = sbr.rel (%p445) target = $region36
      $region35: #{atrous_pyramid_pooling.3} parent=31 // pred_region
        %s448 = smul.u32 2, %s19
      $region36: #{atrous_pyramid_pooling.3} parent=31 // pred_fallthru
        _
    $region32: #{atrous_pyramid_pooling.3} parent=5 // pred_fallthru
      _
    %p449 = scmp.le.s32.totalorder 2, %s9
    // Predicated region
    $region37: #{atrous_pyramid_pooling.3} parent=5 // pred_check
      %p450 = pneg %p449
    $region38: #{atrous_pyramid_pooling.3} parent=5 // pred_check_branch
      %452 = sbr.rel (%p450) target = $region40
    $region39: #{atrous_pyramid_pooling.3} parent=5 // pred_region
      %s453 = ssub.s32 %s9, 2
      // Predicated region
      $region41: #{atrous_pyramid_pooling.3} parent=39 // pred_check
        %p454 = pneg %p127
      $region42: #{atrous_pyramid_pooling.3} parent=39 // pred_check_branch
        %456 = sbr.rel (%p454) target = $region44
      $region43: #{atrous_pyramid_pooling.3} parent=39 // pred_region
        %s457 = smul.u32 2, %s21
        %p458 = scmp.lt.s32.totalorder %s20, 1
        %s459 = scalar_select %p458, %s20, 1
        %p460 = scmp.lt.s32.totalorder %s457, 1
        %s461 = scalar_select %p460, %s457, 1
        %s462 = smul.addr %s459, 8
        %s463 = sadd.s32 %s461, %s462
        %s464 = smul.addr %s463, 8
        %s465 = scalar_lea.vmem %s3, %s464
      $region44: #{atrous_pyramid_pooling.3} parent=39 // pred_fallthru
        _
    $region40: #{atrous_pyramid_pooling.3} parent=5 // pred_fallthru
      _
  $region6: #{atrous_pyramid_pooling.3} parent=0 // loop_footer
    %s13 = sadd.s32 1, %s9
  $region7: #{atrous_pyramid_pooling.3} parent=0 // loop_footer_branch
    %8 = sbr.rel target = $region3
  $region8: #{atrous_pyramid_pooling.3} parent=0 // loop_exit
    _

</llo_original>
